<compile_context>
chip_gen: v7x
topology: tpu7x:2x2x1
jax: 0.10.0
libtpu: 0.0.40
codegen_flags: <defaults>
</compile_context>

<pallas_src>
import math

import jax
import jax.numpy as jnp
from jax.experimental import pallas as pl
from jax.experimental.pallas import tpu as pltpu


# ----------------------------- kernel -------------------------------------------------

_INV_SQRT2 = 1.0 / math.sqrt(2.0)


def _gelu_exact(x):
    # nn.GELU() default = exact erf formulation (kept for bit-fidelity to PyTorch).
    return 0.5 * x * (1.0 + jax.lax.erf(x * _INV_SQRT2))


def ffn_kernel(x_ref, w1_ref, b1_ref, w2_ref, b2_ref, o_ref):
    # x_ref block: (TM, C_in) f32; w1_ref/w2_ref are full bf16 weights resident in VMEM.
    x = x_ref[...]
    # MXU is natively bf16 on v5e/v6e/v7x: bf16 operands, f32 accumulation.
    h = jnp.dot(x.astype(jnp.bfloat16), w1_ref[...],
                preferred_element_type=jnp.float32)
    h = h + b1_ref[...]                      # bias add in f32
    h = _gelu_exact(h)                       # exact erf GELU in f32
    # dropout (p=0.1) is identity in inference mode.
    y = jnp.dot(h.astype(jnp.bfloat16), w2_ref[...],
                preferred_element_type=jnp.float32)
    y = y + b2_ref[...]
    o_ref[...] = y.astype(o_ref.dtype)


# ----------------------------- tiling helpers ------------------------------------------


def _choose_row_tile(m):
    """Pick the row tile TM.

    - Always give the 'parallel' row axis >=2 grid steps when m allows, so
      v7x's second TensorCore gets work.
    - Keep TM a multiple of 8 (sublane) and prefer 256-multiples at large M
      (fills the 256x256 MXU per push on v6e/v7x).
    """
    if m <= 8:
        return m                               # single tile == full dim
    if m <= 1024:
        half = -(-m // 2)                      # cdiv(m, 2): 2 grid steps
        if half % 256 == 0:
            return half
        return ((half + 7) // 8) * 8           # round up to a sublane multiple
    return 512                                 # large M: big 256-multiple tiles


def _vmem_limit_bytes(tm, c_in, hidden, c_out, weight_bufs):
    """Scoped-VMEM request: above the defaults (16/32/32 MiB), below v7x physical."""
    f32, bf16 = 4, 2
    w = weight_bufs * (c_in * hidden + hidden * c_out) * bf16       # weights
    b = 2 * (hidden + c_out) * f32                                  # biases (2 bufs)
    io = 2 * tm * (c_in + c_out) * f32                              # x / out double-buffered
    live = tm * hidden * (f32 + bf16) + tm * c_out * f32            # h (f32 + bf16), y
    need = w + b + io + live
    return int(min(max(2 * need, 32 << 20), 56 << 20))


# ----------------------------- wrapper ------------------------------------------------


def feed_forward(x, params):
    """x: (..., in_features) float32.  params: W1 (C,H), b1 (1,H), W2 (H,O), b2 (1,O)."""
    orig_shape = x.shape
    c_in = orig_shape[-1]
    hidden = params["W1"].shape[1]
    c_out = params["W2"].shape[1]

    x2d = x.reshape(-1, c_in).astype(jnp.float32)
    m = x2d.shape[0]

    tm = _choose_row_tile(m)
    m_pad = -(-m // tm) * tm
    if m_pad != m:
        x2d = jnp.pad(x2d, ((0, m_pad - m), (0, 0)))
    grid = (m_pad // tm,)

    # bf16 weights: halves HBM weight traffic and feeds the MXU natively.
    w1 = params["W1"].astype(jnp.bfloat16)
    w2 = params["W2"].astype(jnp.bfloat16)
    b1 = params["b1"].astype(jnp.float32)
    b2 = params["b2"].astype(jnp.float32)

    cost = pl.CostEstimate(
        flops=2 * m_pad * (c_in * hidden + hidden * c_out),
        transcendentals=m_pad * hidden,
        bytes_accessed=(4 * m_pad * (c_in + c_out)               # x in, y out (f32)
                        + 2 * (c_in * hidden + hidden * c_out)   # bf16 weights
                        + 4 * (hidden + c_out)),                 # f32 biases
    )

    def build(weight_buffer_count):
        if weight_buffer_count is None:
            w1_spec = pl.BlockSpec((c_in, hidden), lambda i: (0, 0))
            w2_spec = pl.BlockSpec((hidden, c_out), lambda i: (0, 0))
        else:
            # Constant index_map => single buffer is enough; halves weight VMEM.
            w1_spec = pl.BlockSpec((c_in, hidden), lambda i: (0, 0),
                                   pipeline_mode=pl.Buffered(weight_buffer_count))
            w2_spec = pl.BlockSpec((hidden, c_out), lambda i: (0, 0),
                                   pipeline_mode=pl.Buffered(weight_buffer_count))
        return pl.pallas_call(
            ffn_kernel,
            out_shape=jax.ShapeDtypeStruct((m_pad, c_out), jnp.float32),
            grid_spec=pltpu.PrefetchScalarGridSpec(
                num_scalar_prefetch=0,
                grid=grid,
                in_specs=[
                    pl.BlockSpec((tm, c_in), lambda i: (i, 0)),       # x rows
                    w1_spec,                                          # W1 (bf16)
                    pl.BlockSpec((1, hidden), lambda i: (0, 0)),      # b1
                    w2_spec,                                          # W2 (bf16)
                    pl.BlockSpec((1, c_out), lambda i: (0, 0)),       # b2
                ],
                out_specs=pl.BlockSpec((tm, c_out), lambda i: (i, 0)),
            ),
            compiler_params=pltpu.CompilerParams(
                dimension_semantics=("parallel",),
                vmem_limit_bytes=_vmem_limit_bytes(
                    tm, c_in, hidden, c_out,
                    1 if weight_buffer_count else 2),
            ),
            cost_estimate=cost,
        )

    try:
        out2d = build(1)(x2d, w1, b1, w2, b2)
    except Exception:
        # Older JAX without BlockSpec(pipeline_mode=...) support -> default specs.
        out2d = build(None)(x2d, w1, b1, w2, b2)

    if m_pad != m:
        out2d = out2d[:m]
    return out2d.reshape(*orig_shape[:-1], c_out)


# ----------------------------- pure JAX reference (for verification) ------------------


def reference(x, params):
    h = x @ params["W1"] + params["b1"][0]
    h = jax.nn.gelu(h, approximate=False)
    y = h @ params["W2"] + params["b2"][0]
    return y


# ----------------------------- main ---------------------------------------------------

if __name__ == "__main__":
    # Small but lane-dense shapes: batch=2, seq=8, in_features=128, hidden=256.
    B, S, C, H = 2, 8, 128, 256

    key = jax.random.PRNGKey(0)
    k_x, k_w1, k_b1, k_w2, k_b2 = jax.random.split(key, 5)
    nrm = lambda k, shape, s=0.05: (s * jax.random.normal(k, shape)).astype(jnp.float32)

    params = {
        "W1": nrm(k_w1, (C, H)),
        "b1": nrm(k_b1, (1, H)),
        "W2": nrm(k_w2, (H, C)),
        "b2": nrm(k_b2, (1, C)),
    }
    x = jax.random.normal(k_x, (B, S, C), jnp.float32)

    out = feed_forward(x, params)
    out = jax.block_until_ready(out)

    ref = reference(x, params)
    assert out.shape == (B, S, C)
    # bf16 MXU operands (f32 accumulation) -> relaxed tolerance vs. f32 reference.
    assert jnp.allclose(out, ref, rtol=2e-2, atol=2e-2), \
        f"mismatch: max abs err {jnp.max(jnp.abs(out - ref))}"

    print("KERNEL_OK")
</pallas_src>

<mosaic_0001>
module attributes {stable_mosaic.version = 11 : i64} {
  func.func @ffn_kernel(%arg0: i32, %arg1: memref<8x128xf32, #tpu.memory_space<vmem>>, %arg2: memref<128x256xbf16, #tpu.memory_space<vmem>>, %arg3: memref<1x256xf32, #tpu.memory_space<vmem>>, %arg4: memref<256x128xbf16, #tpu.memory_space<vmem>>, %arg5: memref<1x128xf32, #tpu.memory_space<vmem>>, %arg6: memref<8x128xf32, #tpu.memory_space<vmem>>) attributes {dimension_semantics = [#tpu.dimension_semantics<parallel>], iteration_bounds = array<i64: 2>, scalar_prefetch = 0 : i64, scratch_operands = 0 : i64, tpu.core_type = #tpu.core_type<tc>, window_params = [{transform_indices = @transform_0, window_bounds = array<i64: 8, 128>}, {pipeline_mode = #tpu.pipeline_mode<synchronous>, transform_indices = @transform_1, window_bounds = array<i64: 128, 256>}, {pipeline_mode = #tpu.pipeline_mode<synchronous>, transform_indices = @transform_2, window_bounds = array<i64: 1, 256>}, {pipeline_mode = #tpu.pipeline_mode<synchronous>, transform_indices = @transform_3, window_bounds = array<i64: 256, 128>}, {pipeline_mode = #tpu.pipeline_mode<synchronous>, transform_indices = @transform_4, window_bounds = array<i64: 1, 128>}, {transform_indices = @transform_5, window_bounds = array<i64: 8, 128>}]} {
    %c0 = arith.constant 0 : index
    %c0_0 = arith.constant 0 : index
    %0 = vector.load %arg1[%c0, %c0_0] : memref<8x128xf32, #tpu.memory_space<vmem>>, vector<8x128xf32>
    %1 = arith.truncf %0 : vector<8x128xf32> to vector<8x128xbf16>
    %c0_1 = arith.constant 0 : index
    %c0_2 = arith.constant 0 : index
    %2 = vector.load %arg2[%c0_1, %c0_2] : memref<128x256xbf16, #tpu.memory_space<vmem>>, vector<128x256xbf16>
    %cst = arith.constant dense<0.000000e+00> : vector<8x256xf32>
    %3 = tpu.matmul %1, %2, %cst {dimension_numbers = #tpu.dot_dimension_numbers<[1], [0], [0], [1], [0, 0, 1, 1], [], []>} : vector<8x128xbf16>, vector<128x256xbf16>, vector<8x256xf32> -> vector<8x256xf32>
    %c0_3 = arith.constant 0 : index
    %c0_4 = arith.constant 0 : index
    %4 = vector.load %arg3[%c0_3, %c0_4] : memref<1x256xf32, #tpu.memory_space<vmem>>, vector<1x256xf32>
    %5 = vector.broadcast %4 : vector<1x256xf32> to vector<8x256xf32>
    %6 = arith.addf %3, %5 : vector<8x256xf32>
    %cst_5 = arith.constant 5.000000e-01 : f32
    %7 = vector.broadcast %cst_5 : f32 to vector<8x256xf32>
    %8 = arith.mulf %7, %6 : vector<8x256xf32>
    %cst_6 = arith.constant 0.707106769 : f32
    %9 = vector.broadcast %cst_6 : f32 to vector<8x256xf32>
    %10 = arith.mulf %6, %9 : vector<8x256xf32>
    %11 = math.erf %10 : vector<8x256xf32>
    %cst_7 = arith.constant 1.000000e+00 : f32
    %12 = vector.broadcast %cst_7 : f32 to vector<8x256xf32>
    %13 = arith.addf %12, %11 : vector<8x256xf32>
    %14 = arith.mulf %8, %13 : vector<8x256xf32>
    %15 = arith.truncf %14 : vector<8x256xf32> to vector<8x256xbf16>
    %c0_8 = arith.constant 0 : index
    %c0_9 = arith.constant 0 : index
    %16 = vector.load %arg4[%c0_8, %c0_9] : memref<256x128xbf16, #tpu.memory_space<vmem>>, vector<256x128xbf16>
    %cst_10 = arith.constant dense<0.000000e+00> : vector<8x128xf32>
    %17 = tpu.matmul %15, %16, %cst_10 {dimension_numbers = #tpu.dot_dimension_numbers<[1], [0], [0], [1], [0, 0, 1, 1], [], []>} : vector<8x256xbf16>, vector<256x128xbf16>, vector<8x128xf32> -> vector<8x128xf32>
    %c0_11 = arith.constant 0 : index
    %c0_12 = arith.constant 0 : index
    %18 = vector.load %arg5[%c0_11, %c0_12] : memref<1x128xf32, #tpu.memory_space<vmem>>, vector<1x128xf32>
    %19 = vector.broadcast %18 : vector<1x128xf32> to vector<8x128xf32>
    %20 = arith.addf %17, %19 : vector<8x128xf32>
    %c0_13 = arith.constant 0 : index
    %c0_14 = arith.constant 0 : index
    %21 = vector.load %arg6[%c0_13, %c0_14] : memref<8x128xf32, #tpu.memory_space<vmem>>, vector<8x128xf32>
    tpu.vector_store %arg6[%c0_13, %c0_14], %20 {strides = array<i32>} : memref<8x128xf32, #tpu.memory_space<vmem>>, vector<8x128xf32>,
    return
  }
  func.func @transform_0(%arg0: i32) -> (i32, i32) {
    %c0_i32 = arith.constant 0 : i32
    %c0_i32_0 = arith.constant 0 : i32
    return %arg0, %c0_i32 : i32, i32
  }
  func.func @transform_1(%arg0: i32) -> (i32, i32) {
    %c0_i32 = arith.constant 0 : i32
    %c0_i32_0 = arith.constant 0 : i32
    %c0_i32_1 = arith.constant 0 : i32
    return %c0_i32, %c0_i32_0 : i32, i32
  }
  func.func @transform_2(%arg0: i32) -> (i32, i32) {
    %c0_i32 = arith.constant 0 : i32
    %c0_i32_0 = arith.constant 0 : i32
    %c0_i32_1 = arith.constant 0 : i32
    return %c0_i32, %c0_i32_0 : i32, i32
  }
  func.func @transform_3(%arg0: i32) -> (i32, i32) {
    %c0_i32 = arith.constant 0 : i32
    %c0_i32_0 = arith.constant 0 : i32
    %c0_i32_1 = arith.constant 0 : i32
    return %c0_i32, %c0_i32_0 : i32, i32
  }
  func.func @transform_4(%arg0: i32) -> (i32, i32) {
    %c0_i32 = arith.constant 0 : i32
    %c0_i32_0 = arith.constant 0 : i32
    %c0_i32_1 = arith.constant 0 : i32
    return %c0_i32, %c0_i32_0 : i32, i32
  }
  func.func @transform_5(%arg0: i32) -> (i32, i32) {
    %c0_i32 = arith.constant 0 : i32
    %c0_i32_0 = arith.constant 0 : i32
    return %arg0, %c0_i32 : i32, i32
  }
}

module attributes {stable_mosaic.version = 11 : i64} {
  func.func @ffn_kernel(%arg0: i32, %arg1: memref<8x128xf32, #tpu.memory_space<vmem>>, %arg2: memref<128x256xbf16, #tpu.memory_space<vmem>>, %arg3: memref<1x256xf32, #tpu.memory_space<vmem>>, %arg4: memref<256x128xbf16, #tpu.memory_space<vmem>>, %arg5: memref<1x128xf32, #tpu.memory_space<vmem>>, %arg6: memref<8x128xf32, #tpu.memory_space<vmem>>) attributes {dimension_semantics = [#tpu.dimension_semantics<parallel>], iteration_bounds = array<i64: 2>, scalar_prefetch = 0 : i64, scratch_operands = 0 : i64, tpu.core_type = #tpu.core_type<tc>, window_params = [{transform_indices = @transform_0, window_bounds = array<i64: 8, 128>}, {pipeline_mode = #tpu.pipeline_mode<synchronous>, transform_indices = @transform_1, window_bounds = array<i64: 128, 256>}, {pipeline_mode = #tpu.pipeline_mode<synchronous>, transform_indices = @transform_2, window_bounds = array<i64: 1, 256>}, {pipeline_mode = #tpu.pipeline_mode<synchronous>, transform_indices = @transform_3, window_bounds = array<i64: 256, 128>}, {pipeline_mode = #tpu.pipeline_mode<synchronous>, transform_indices = @transform_4, window_bounds = array<i64: 1, 128>}, {transform_indices = @transform_5, window_bounds = array<i64: 8, 128>}]} {
    %c0 = arith.constant 0 : index
    %c0_0 = arith.constant 0 : index
    %0 = vector.load %arg1[%c0, %c0_0] : memref<8x128xf32, #tpu.memory_space<vmem>>, vector<8x128xf32>
    %1 = arith.truncf %0 : vector<8x128xf32> to vector<8x128xbf16>
    %c0_1 = arith.constant 0 : index
    %c0_2 = arith.constant 0 : index
    %2 = vector.load %arg2[%c0_1, %c0_2] : memref<128x256xbf16, #tpu.memory_space<vmem>>, vector<128x256xbf16>
    %cst = arith.constant dense<0.000000e+00> : vector<8x256xf32>
    %3 = tpu.matmul %1, %2, %cst {dimension_numbers = #tpu.dot_dimension_numbers<[1], [0], [0], [1], [0, 0, 1, 1], [], []>} : vector<8x128xbf16>, vector<128x256xbf16>, vector<8x256xf32> -> vector<8x256xf32>
    %c0_3 = arith.constant 0 : index
    %c0_4 = arith.constant 0 : index
    %4 = vector.load %arg3[%c0_3, %c0_4] : memref<1x256xf32, #tpu.memory_space<vmem>>, vector<1x256xf32>
    %5 = vector.broadcast %4 : vector<1x256xf32> to vector<8x256xf32>
    %6 = arith.addf %3, %5 : vector<8x256xf32>
    %cst_5 = arith.constant 5.000000e-01 : f32
    %7 = vector.broadcast %cst_5 : f32 to vector<8x256xf32>
    %8 = arith.mulf %7, %6 : vector<8x256xf32>
    %cst_6 = arith.constant 0.707106769 : f32
    %9 = vector.broadcast %cst_6 : f32 to vector<8x256xf32>
    %10 = arith.mulf %6, %9 : vector<8x256xf32>
    %11 = math.erf %10 : vector<8x256xf32>
    %cst_7 = arith.constant 1.000000e+00 : f32
    %12 = vector.broadcast %cst_7 : f32 to vector<8x256xf32>
    %13 = arith.addf %12, %11 : vector<8x256xf32>
    %14 = arith.mulf %8, %13 : vector<8x256xf32>
    %15 = arith.truncf %14 : vector<8x256xf32> to vector<8x256xbf16>
    %c0_8 = arith.constant 0 : index
    %c0_9 = arith.constant 0 : index
    %16 = vector.load %arg4[%c0_8, %c0_9] : memref<256x128xbf16, #tpu.memory_space<vmem>>, vector<256x128xbf16>
    %cst_10 = arith.constant dense<0.000000e+00> : vector<8x128xf32>
    %17 = tpu.matmul %15, %16, %cst_10 {dimension_numbers = #tpu.dot_dimension_numbers<[1], [0], [0], [1], [0, 0, 1, 1], [], []>} : vector<8x256xbf16>, vector<256x128xbf16>, vector<8x128xf32> -> vector<8x128xf32>
    %c0_11 = arith.constant 0 : index
    %c0_12 = arith.constant 0 : index
    %18 = vector.load %arg5[%c0_11, %c0_12] : memref<1x128xf32, #tpu.memory_space<vmem>>, vector<1x128xf32>
    %19 = vector.broadcast %18 : vector<1x128xf32> to vector<8x128xf32>
    %20 = arith.addf %17, %19 : vector<8x128xf32>
    %c0_13 = arith.constant 0 : index
    %c0_14 = arith.constant 0 : index
    %21 = vector.load %arg6[%c0_13, %c0_14] : memref<8x128xf32, #tpu.memory_space<vmem>>, vector<8x128xf32>
    tpu.vector_store %arg6[%c0_13, %c0_14], %20 {strides = array<i32>} : memref<8x128xf32, #tpu.memory_space<vmem>>, vector<8x128xf32>,
    return
  }
  func.func @transform_0(%arg0: i32) -> (i32, i32) {
    %c0_i32 = arith.constant 0 : i32
    %c0_i32_0 = arith.constant 0 : i32
    return %arg0, %c0_i32 : i32, i32
  }
  func.func @transform_1(%arg0: i32) -> (i32, i32) {
    %c0_i32 = arith.constant 0 : i32
    %c0_i32_0 = arith.constant 0 : i32
    %c0_i32_1 = arith.constant 0 : i32
    return %c0_i32, %c0_i32_0 : i32, i32
  }
  func.func @transform_2(%arg0: i32) -> (i32, i32) {
    %c0_i32 = arith.constant 0 : i32
    %c0_i32_0 = arith.constant 0 : i32
    %c0_i32_1 = arith.constant 0 : i32
    return %c0_i32, %c0_i32_0 : i32, i32
  }
  func.func @transform_3(%arg0: i32) -> (i32, i32) {
    %c0_i32 = arith.constant 0 : i32
    %c0_i32_0 = arith.constant 0 : i32
    %c0_i32_1 = arith.constant 0 : i32
    return %c0_i32, %c0_i32_0 : i32, i32
  }
  func.func @transform_4(%arg0: i32) -> (i32, i32) {
    %c0_i32 = arith.constant 0 : i32
    %c0_i32_0 = arith.constant 0 : i32
    %c0_i32_1 = arith.constant 0 : i32
    return %c0_i32, %c0_i32_0 : i32, i32
  }
  func.func @transform_5(%arg0: i32) -> (i32, i32) {
    %c0_i32 = arith.constant 0 : i32
    %c0_i32_0 = arith.constant 0 : i32
    return %arg0, %c0_i32 : i32, i32
  }
}

</mosaic_0001>

<llo_original>
// kernel: tpu_custom_call.1
$region0: #{tpu_custom_call.1}
  #allocation0 [shape = 'u32[]', space=smem, size = 0x4, offset = 0x4, fixed_abs, tag = 'smem constant byte address 0x4 - core index']
  #allocation1 [shape = 'u32[144,128]{1,0:T(1,128)}', space=vmem, size = 0x12000, scoped, tag = 'internal scratch']
  %s0 = inlined_call_operand.hbm [shape: f32[16,128], index: 0, kind: input, shape index: {}]
  %s1 = inlined_call_operand.hbm [shape: bf16[128,256], index: 1, kind: input, shape index: {}]
  %s2 = inlined_call_operand.vmem [shape: f32[1,256], index: 2, kind: input, shape index: {}]
  %s3 = inlined_call_operand.hbm [shape: bf16[256,128], index: 3, kind: input, shape index: {}]
  %s4 = inlined_call_operand.vmem [shape: f32[1,128], index: 4, kind: input, shape index: {}]
  %s5 = inlined_call_operand.hbm [shape: f32[16,128], index: 5, kind: output, shape index: {}]
  %s6 = sld [smem:[#allocation0]]
  $region65: #{tpu_custom_call.1} parent=0
    _
  %s8 = ssub.s32 1, %s6
  %s9 = scalar_select 0, %s8, %s6
  $region1: #{tpu_custom_call.1} parent=0
    #allocation2 [shape = 'u8[8192]{0}', space=vmem, size = 0x2000, scoped, tag = 'input window, operand 0']
    #allocation3 [shape = 's32[2]{0}', space=sflag, size = 0x8, scoped, tag = 'scoped memory for tpu_custom_call.1']
    #allocation4 [shape = 's32[2]{0}', space=sflag, size = 0x8, scoped, tag = 'scoped memory for tpu_custom_call.1']
    #allocation5 [shape = 'u8[65536]{0}', space=vmem, size = 0x10000, scoped, tag = 'input window, operand 1, single buffered']
    #allocation6 [shape = 's32[1]{0}', space=sflag, size = 0x4, scoped, tag = 'scoped memory for tpu_custom_call.1']
    #allocation7 [shape = 'u8[65536]{0}', space=vmem, size = 0x10000, scoped, tag = 'input window, operand 3, single buffered']
    #allocation8 [shape = 'u8[8192]{0}', space=vmem, size = 0x2000, scoped, tag = 'output window, operand 0']
    %10 = vsyncpa [#allocation3], 0
    %s11 = scalar_lea.sflag [#allocation3], 1
    %12 = vsyncpa %s11, 0
    %13 = vsyncpa [#allocation6], 0
    %14 = vsyncpa [#allocation4], 0
    %s15 = scalar_lea.sflag [#allocation4], 1
    %16 = vsyncpa %s15, 0
    loop: start=0, step=1, limit=4
    $region2: #{tpu_custom_call.1} parent=1 // loop_pre_header
      _
    $region3: #{tpu_custom_call.1} parent=1 // loop_header
      %s18 = sphi 0, %s22
      %p19 = scmp.ge.s32.totalorder %s18, 4
      %s28 = sphi 0, %s30
      %s31 = sphi 0, %s28
      %s32 = sphi 0, %s31
      %s48 = sphi 0, %s32
      %s52 = sphi 0, %s52
      %s54 = sphi 0, %s52
      %s55 = sphi 0, %s54
      %s69 = sphi 0, %s55
      %s73 = sphi 0, %s73
      %s75 = sphi 0, %s73
      %s76 = sphi 0, %s75
      %s90 = sphi 0, %s76
      %s94 = sphi 0, %s94
      %s96 = sphi 0, %s94
      %s97 = sphi 0, %s96
      %s111 = sphi 0, %s97
      %s115 = sphi 0, %s115
      %s117 = sphi 0, %s115
      %s118 = sphi 0, %s117
      %s132 = sphi 0, %s118
      %s138 = sphi 0, %s140
      %s141 = sphi 0, %s138
      %s142 = sphi 0, %s141
      %s158 = sphi 0, %s142
    $region4: #{tpu_custom_call.1} parent=1 // loop_header_branch
      %21 = sbr.rel (%p19) target = $region8
    $region5: #{tpu_custom_call.1} parent=1 // loop_body
      %s23 = ssub.s32 %s18, 1
      %s24 = ssub.s32 %s18, 2
      %s25 = sadd.s32 %s18, 1
      %s26 = ssub.s32 %s18, %s25
      %p27 = scmp.eq.s32.totalorder %s26, 0
      %s29 = sadd.s32 %s28, 1
      %s30 = scalar_select %p27, %s28, %s29
      %p33 = pneg %p27
      %p34 = scmp.eq.s32.totalorder %s18, 1
      %p35 = por %p33, %p34
      %p36 = scmp.ne.s32.totalorder %s28, %s31
      %p37 = scmp.eq.s32.totalorder %s18, 0
      %p38 = por %p36, %p37
      %p39 = scmp.ne.s32.totalorder %s28, %s31
      %p40 = scmp.eq.s32.totalorder %s23, 1
      %p41 = por %p39, %p40
      %p42 = scmp.ne.s32.totalorder %s31, %s32
      %p43 = scmp.eq.s32.totalorder %s23, 0
      %p44 = por %p42, %p43
      %p45 = scmp.ne.s32.totalorder %s31, %s32
      %p46 = scmp.eq.s32.totalorder %s24, 1
      %p47 = por %p45, %p46
      %p49 = scmp.ne.s32.totalorder %s32, %s48
      %p50 = scmp.eq.s32.totalorder %s24, 0
      %p51 = por %p49, %p50
      %s53 = sadd.s32 %s52, 1
      %p56 = scmp.eq.s32.totalorder %s18, 1
      %p57 = scmp.ne.s32.totalorder %s52, %s54
      %p58 = scmp.eq.s32.totalorder %s18, 0
      %p59 = por %p57, %p58
      %p60 = scmp.ne.s32.totalorder %s52, %s54
      %p61 = scmp.eq.s32.totalorder %s23, 1
      %p62 = por %p60, %p61
      %p63 = scmp.ne.s32.totalorder %s54, %s55
      %p64 = scmp.eq.s32.totalorder %s23, 0
      %p65 = por %p63, %p64
      %p66 = scmp.ne.s32.totalorder %s54, %s55
      %p67 = scmp.eq.s32.totalorder %s24, 1
      %p68 = por %p66, %p67
      %p70 = scmp.ne.s32.totalorder %s55, %s69
      %p71 = scmp.eq.s32.totalorder %s24, 0
      %p72 = por %p70, %p71
      %s74 = sadd.s32 %s73, 1
      %p77 = scmp.eq.s32.totalorder %s18, 1
      %p78 = scmp.ne.s32.totalorder %s73, %s75
      %p79 = scmp.eq.s32.totalorder %s18, 0
      %p80 = por %p78, %p79
      %p81 = scmp.ne.s32.totalorder %s73, %s75
      %p82 = scmp.eq.s32.totalorder %s23, 1
      %p83 = por %p81, %p82
      %p84 = scmp.ne.s32.totalorder %s75, %s76
      %p85 = scmp.eq.s32.totalorder %s23, 0
      %p86 = por %p84, %p85
      %p87 = scmp.ne.s32.totalorder %s75, %s76
      %p88 = scmp.eq.s32.totalorder %s24, 1
      %p89 = por %p87, %p88
      %p91 = scmp.ne.s32.totalorder %s76, %s90
      %p92 = scmp.eq.s32.totalorder %s24, 0
      %p93 = por %p91, %p92
      %s95 = sadd.s32 %s94, 1
      %p98 = scmp.eq.s32.totalorder %s18, 1
      %p99 = scmp.ne.s32.totalorder %s94, %s96
      %p100 = scmp.eq.s32.totalorder %s18, 0
      %p101 = por %p99, %p100
      %p102 = scmp.ne.s32.totalorder %s94, %s96
      %p103 = scmp.eq.s32.totalorder %s23, 1
      %p104 = por %p102, %p103
      %p105 = scmp.ne.s32.totalorder %s96, %s97
      %p106 = scmp.eq.s32.totalorder %s23, 0
      %p107 = por %p105, %p106
      %p108 = scmp.ne.s32.totalorder %s96, %s97
      %p109 = scmp.eq.s32.totalorder %s24, 1
      %p110 = por %p108, %p109
      %p112 = scmp.ne.s32.totalorder %s97, %s111
      %p113 = scmp.eq.s32.totalorder %s24, 0
      %p114 = por %p112, %p113
      %s116 = sadd.s32 %s115, 1
      %p119 = scmp.eq.s32.totalorder %s18, 1
      %p120 = scmp.ne.s32.totalorder %s115, %s117
      %p121 = scmp.eq.s32.totalorder %s18, 0
      %p122 = por %p120, %p121
      %p123 = scmp.ne.s32.totalorder %s115, %s117
      %p124 = scmp.eq.s32.totalorder %s23, 1
      %p125 = por %p123, %p124
      %p126 = scmp.ne.s32.totalorder %s117, %s118
      %p127 = scmp.eq.s32.totalorder %s23, 0
      %p128 = por %p126, %p127
      %p129 = scmp.ne.s32.totalorder %s117, %s118
      %p130 = scmp.eq.s32.totalorder %s24, 1
      %p131 = por %p129, %p130
      %p133 = scmp.ne.s32.totalorder %s118, %s132
      %p134 = scmp.eq.s32.totalorder %s24, 0
      %p135 = por %p133, %p134
      %s136 = ssub.s32 %s18, %s25
      %p137 = scmp.eq.s32.totalorder %s136, 0
      %s139 = sadd.s32 %s138, 1
      %s140 = scalar_select %p137, %s138, %s139
      %p143 = pneg %p137
      %p144 = scmp.eq.s32.totalorder %s18, 1
      %p145 = por %p143, %p144
      %p146 = scmp.ne.s32.totalorder %s138, %s141
      %p147 = scmp.eq.s32.totalorder %s18, 0
      %p148 = por %p146, %p147
      %p149 = scmp.ne.s32.totalorder %s138, %s141
      %p150 = scmp.eq.s32.totalorder %s23, 1
      %p151 = por %p149, %p150
      %p152 = scmp.ne.s32.totalorder %s141, %s142
      %p153 = scmp.eq.s32.totalorder %s23, 0
      %p154 = por %p152, %p153
      %p155 = scmp.ne.s32.totalorder %s141, %s142
      %p156 = scmp.eq.s32.totalorder %s24, 1
      %p157 = por %p155, %p156
      %p159 = scmp.ne.s32.totalorder %s142, %s158
      %p160 = scmp.eq.s32.totalorder %s24, 0
      %p161 = por %p159, %p160
      %p162 = scmp.le.s32.totalorder 1, %s18
      %p163 = scmp.lt.s32.totalorder %s18, 3
      %p164 = pnand %p162, %p163
      %p165 = pneg %p164
      // Predicated region
      $region9: #{tpu_custom_call.1} parent=5 // pred_check
        _
      $region10: #{tpu_custom_call.1} parent=5 // pred_check_branch
        %167 = sbr.rel (%p164) target = $region12
      $region11: #{tpu_custom_call.1} parent=5 // pred_region
        %s168 = ssub.s32 %s18, 1
        // Predicated region
        $region13: #{tpu_custom_call.1} parent=11 // pred_check
          %p169 = pneg %p65
        $region14: #{tpu_custom_call.1} parent=11 // pred_check_branch
          %171 = sbr.rel (%p169) target = $region16
        $region15: #{tpu_custom_call.1} parent=11 // pred_region
          %s173 = ssub.s32 2048, 2048
          %174 = vsyncadd [#allocation6], %s173
          %s175 = sshll.u32 [#allocation5], 4
          %s176 = int_to_ptr.vmem [resolvable:$true] %s175
          %181 = dma.hbm_to_vmem [thread:$0]  %s1, 2048, %s176, [#allocation6], 128, 128, 8
        $region16: #{tpu_custom_call.1} parent=11 // pred_fallthru
          _
        // Predicated region
        $region17: #{tpu_custom_call.1} parent=11 // pred_check
          %p182 = pneg %p86
        $region18: #{tpu_custom_call.1} parent=11 // pred_check_branch
          %184 = sbr.rel (%p182) target = $region20
        $region19: #{tpu_custom_call.1} parent=11 // pred_region
          _
        $region20: #{tpu_custom_call.1} parent=11 // pred_fallthru
          _
        // Predicated region
        $region21: #{tpu_custom_call.1} parent=11 // pred_check
          %p185 = pneg %p107
        $region22: #{tpu_custom_call.1} parent=11 // pred_check_branch
          %187 = sbr.rel (%p185) target = $region24
        $region23: #{tpu_custom_call.1} parent=11 // pred_region
          %s189 = ssub.s32 2048, 2048
          %190 = vsyncadd [#allocation6], %s189
          %s191 = sshll.u32 [#allocation7], 4
          %s192 = int_to_ptr.vmem [resolvable:$true] %s191
          %197 = dma.hbm_to_vmem [thread:$0]  %s3, 2048, %s192, [#allocation6], 64, 64, 4
        $region24: #{tpu_custom_call.1} parent=11 // pred_fallthru
          _
        // Predicated region
        $region25: #{tpu_custom_call.1} parent=11 // pred_check
          %p198 = pneg %p128
        $region26: #{tpu_custom_call.1} parent=11 // pred_check_branch
          %200 = sbr.rel (%p198) target = $region28
        $region27: #{tpu_custom_call.1} parent=11 // pred_region
          _
        $region28: #{tpu_custom_call.1} parent=11 // pred_fallthru
          _
      $region12: #{tpu_custom_call.1} parent=5 // pred_fallthru
        _
      %p201 = scmp.lt.s32.totalorder %s18, 2
      // Predicated region
      $region29: #{tpu_custom_call.1} parent=5 // pred_check
        %p202 = pneg %p201
      $region30: #{tpu_custom_call.1} parent=5 // pred_check_branch
        %204 = sbr.rel (%p202) target = $region32
      $region31: #{tpu_custom_call.1} parent=5 // pred_region
        // Predicated region
        $region33: #{tpu_custom_call.1} parent=31 // pred_check
          %p205 = pneg %p38
        $region34: #{tpu_custom_call.1} parent=31 // pred_check_branch
          %207 = sbr.rel (%p205) target = $region36
        $region35: #{tpu_custom_call.1} parent=31 // pred_region
          %s208 = sand.u32 %s28, 1
          %s209 = scalar_lea.sflag [#allocation3], %s208
          %s210 = sand.u32 %s28, 1
          %s211 = smul.addr %s210, 8
          %s212 = scalar_lea.vmem [#allocation2], %s211
          %s214 = ssub.s32 128, 128
          %215 = vsyncadd %s209, %s214
          %s216 = smul.addr %s18, 128
          %s217 = scalar_lea.hbm %s0, %s216
          %s219 = sshll.u32 %s212, 4
          %s220 = int_to_ptr.vmem [resolvable:$true] %s219
          %222 = dma.hbm_to_vmem [thread:$0]  %s217, 128, %s220, %s209
        $region36: #{tpu_custom_call.1} parent=31 // pred_fallthru
          _
      $region32: #{tpu_custom_call.1} parent=5 // pred_fallthru
        _
      %p223 = scmp.le.s32.totalorder 1, %s18
      %p224 = scmp.lt.s32.totalorder %s18, 3
      %p225 = pnand %p223, %p224
      %p226 = pneg %p225
      // Predicated region
      $region37: #{tpu_custom_call.1} parent=5 // pred_check
        _
      $region38: #{tpu_custom_call.1} parent=5 // pred_check_branch
        %228 = sbr.rel (%p225) target = $region40
      $region39: #{tpu_custom_call.1} parent=5 // pred_region
        %s229 = ssub.s32 %s18, 1
        %s230 = sand.u32 %s31, 1
        %s231 = scalar_lea.sflag [#allocation3], %s230
        %s232 = sand.u32 %s31, 1
        %s233 = smul.addr %s232, 8
        %s234 = scalar_lea.vmem [#allocation2], %s233
        // Predicated region
        $region41: #{tpu_custom_call.1} parent=39 // pred_check
          %p235 = pneg %p44
        $region42: #{tpu_custom_call.1} parent=39 // pred_check_branch
          %237 = sbr.rel (%p235) target = $region44
        $region43: #{tpu_custom_call.1} parent=39 // pred_region
          %238 = dma.done %s231, 128
        $region44: #{tpu_custom_call.1} parent=39 // pred_fallthru
          _
        // Predicated region
        $region45: #{tpu_custom_call.1} parent=39 // pred_check
          %p239 = pneg %p65
        $region46: #{tpu_custom_call.1} parent=39 // pred_check_branch
          %241 = sbr.rel (%p239) target = $region48
        $region47: #{tpu_custom_call.1} parent=39 // pred_region
          %242 = dma.done [#allocation6], 2048
        $region48: #{tpu_custom_call.1} parent=39 // pred_fallthru
          _
        // Predicated region
        $region49: #{tpu_custom_call.1} parent=39 // pred_check
          %p243 = pneg %p107
        $region50: #{tpu_custom_call.1} parent=39 // pred_check_branch
          %245 = sbr.rel (%p243) target = $region52
        $region51: #{tpu_custom_call.1} parent=39 // pred_region
          %246 = dma.done [#allocation6], 2048
        $region52: #{tpu_custom_call.1} parent=39 // pred_fallthru
          _
        %s247 = sand.u32 %s31, 1
        %s248 = scalar_lea.sflag [#allocation3], %s247
        %s249 = sand.u32 %s31, 1
        %s250 = smul.addr %s249, 8
        %s251 = scalar_lea.vmem [#allocation2], %s250
        %p252 = pneg %p44
        %p253 = pneg %p41
        %p254 = pneg %p65
        %p255 = pneg %p62
        %p256 = pneg %p86
        %p257 = pneg %p83
        %p258 = pneg %p107
        %p259 = pneg %p104
        %p260 = pneg %p128
        %p261 = pneg %p125
        %p262 = pneg %p154
        %p263 = pneg %p151
        %s264 = sand.u32 %s141, 1
        %s265 = scalar_lea.sflag [#allocation4], %s264
        %s266 = sand.u32 %s141, 1
        %s267 = smul.addr %s266, 8
        %s268 = scalar_lea.vmem [#allocation8], %s267
        %v270 = vld [vmem:[%s234] sm:$0xff]
        %v271 = vpack.c.bf16 %v270, %v270
        %v272 = vld [vmem:[#allocation5] sm:$0xff]
        %v273 = vld [vmem:[#allocation5 + $0x8] sm:$0xff]
        %v274 = vld [vmem:[#allocation5 + $0x10] sm:$0xff]
        %v275 = vld [vmem:[#allocation5 + $0x18] sm:$0xff]
        %v276 = vld [vmem:[#allocation5 + $0x20] sm:$0xff]
        %v277 = vld [vmem:[#allocation5 + $0x28] sm:$0xff]
        %v278 = vld [vmem:[#allocation5 + $0x30] sm:$0xff]
        %v279 = vld [vmem:[#allocation5 + $0x38] sm:$0xff]
        %v280 = vld [vmem:[#allocation5 + $0x40] sm:$0xff]
        %v281 = vld [vmem:[#allocation5 + $0x48] sm:$0xff]
        %v282 = vld [vmem:[#allocation5 + $0x50] sm:$0xff]
        %v283 = vld [vmem:[#allocation5 + $0x58] sm:$0xff]
        %v284 = vld [vmem:[#allocation5 + $0x60] sm:$0xff]
        %v285 = vld [vmem:[#allocation5 + $0x68] sm:$0xff]
        %v286 = vld [vmem:[#allocation5 + $0x70] sm:$0xff]
        %v287 = vld [vmem:[#allocation5 + $0x78] sm:$0xff]
        %v288 = vld [vmem:[%s2] sm:$0x3]
        %v290 = vlaneseq
        %v291 = vshrl.u32 %v290, 7
        %v292 = vsub.s32 0, %v291
        %v293 = vrot.slane %v288, %v292
        %v294 = vlaneseq
        %v295 = vshrl.u32 %v294, 7
        %v296 = vsub.s32 1, %v295
        %v297 = vrot.slane %v288, %v296
        %v316 = vunpack.c.l.b16 %v272
        %v317 = vunpack.c.h.b16 %v272
        %v318 = vunpack.c.l.b16 %v273
        %v319 = vunpack.c.h.b16 %v273
        %v320 = vunpack.c.l.b16 %v274
        %v321 = vunpack.c.h.b16 %v274
        %v322 = vunpack.c.l.b16 %v275
        %v323 = vunpack.c.h.b16 %v275
        %v324 = vunpack.c.l.b16 %v276
        %v325 = vunpack.c.h.b16 %v276
        %v326 = vunpack.c.l.b16 %v277
        %v327 = vunpack.c.h.b16 %v277
        %v328 = vunpack.c.l.b16 %v278
        %v329 = vunpack.c.h.b16 %v278
        %v330 = vunpack.c.l.b16 %v279
        %v331 = vunpack.c.h.b16 %v279
        %v332 = vunpack.c.l.b16 %v280
        %v333 = vunpack.c.h.b16 %v280
        %v334 = vunpack.c.l.b16 %v281
        %v335 = vunpack.c.h.b16 %v281
        %v336 = vunpack.c.l.b16 %v282
        %v337 = vunpack.c.h.b16 %v282
        %v338 = vunpack.c.l.b16 %v283
        %v339 = vunpack.c.h.b16 %v283
        %v340 = vunpack.c.l.b16 %v284
        %v341 = vunpack.c.h.b16 %v284
        %v342 = vunpack.c.l.b16 %v285
        %v343 = vunpack.c.h.b16 %v285
        %v344 = vunpack.c.l.b16 %v286
        %v345 = vunpack.c.h.b16 %v286
        %v346 = vunpack.c.l.b16 %v287
        %v347 = vunpack.c.h.b16 %v287
        %v348 = vpack.c.b16 %v318, %v316
        %v349 = vpack.c.b16 %v319, %v317
        %v350 = vpack.c.b16 %v322, %v320
        %v351 = vpack.c.b16 %v323, %v321
        %v352 = vpack.c.b16 %v326, %v324
        %v353 = vpack.c.b16 %v327, %v325
        %v354 = vpack.c.b16 %v330, %v328
        %v355 = vpack.c.b16 %v331, %v329
        %v356 = vpack.c.b16 %v334, %v332
        %v357 = vpack.c.b16 %v335, %v333
        %v358 = vpack.c.b16 %v338, %v336
        %v359 = vpack.c.b16 %v339, %v337
        %v360 = vpack.c.b16 %v342, %v340
        %v361 = vpack.c.b16 %v343, %v341
        %v362 = vpack.c.b16 %v346, %v344
        %v363 = vpack.c.b16 %v347, %v345
        %380 = vmatprep.subr.bf16.mxu0 %v349
        %381 = vmatpush1.bf16.msra.mxu0 %v348
        %382 = vmatprep.subr.bf16.mxu0 %v351
        %383 = vmatpush1.bf16.msra.mxu0 %v350
        %384 = vmatprep.subr.bf16.mxu0 %v353
        %385 = vmatpush1.bf16.msra.mxu0 %v352
        %386 = vmatprep.subr.bf16.mxu0 %v355
        %387 = vmatpush1.bf16.msra.mxu0 %v354
        %388 = vmatprep.subr.bf16.mxu0 %v357
        %389 = vmatpush1.bf16.msra.mxu0 %v356
        %390 = vmatprep.subr.bf16.mxu0 %v359
        %391 = vmatpush1.bf16.msra.mxu0 %v358
        %392 = vmatprep.subr.bf16.mxu0 %v361
        %393 = vmatpush1.bf16.msra.mxu0 %v360
        %394 = vmatprep.subr.bf16.mxu0 %v363
        %395 = vmatpush1.bf16.msra.mxu0 %v362
        %396 = vmatprep.subr.bf16.mxu0 0
        %397 = vmatpush1.bf16.msra.mxu0 0
        %398 = vmatprep.subr.bf16.mxu0 0
        %399 = vmatpush1.bf16.msra.mxu0 0
        %400 = vmatprep.subr.bf16.mxu0 0
        %401 = vmatpush1.bf16.msra.mxu0 0
        %402 = vmatprep.subr.bf16.mxu0 0
        %403 = vmatpush1.bf16.msra.mxu0 0
        %404 = vmatprep.subr.bf16.mxu0 0
        %405 = vmatpush1.bf16.msra.mxu0 0
        %406 = vmatprep.subr.bf16.mxu0 0
        %407 = vmatpush1.bf16.msra.mxu0 0
        %408 = vmatprep.subr.bf16.mxu0 0
        %409 = vmatpush1.bf16.msra.mxu0 0
        %410 = vmatprep.subr.bf16.mxu0 0
        %411 = vmatpush1.bf16.msra.mxu0 0
        %412 = vmatprep.mubr.bf16.mxu0 0
        %413 = vmatmul.mubr.bf16.gmra.mrb[0].mxu0 %v271
        %v414 = vpop.f32.mrb[0].mxu0
        %v415 = vadd.f32 %v293, %v414
        %v416 = vpop.f32.mrb[0].mxu0
        %v417 = vadd.f32 %v297, %v416
        %v418 = vpop.f32.mrb[0].mxu0
        %v419 = vpop.f32.mrb[0].mxu0
        %420 = vdwg.mxu0
        %v421 = vmul.f32 %v415, 0.5
        %v422 = vmul.f32 %v417, 0.5
        %v423 = vmul.f32 %v415, 0.70710677
        %v424 = vmul.f32 %v417, 0.70710677
        %v425 = verf.f32.pop %v423
        %v426 = verf.f32.pop %v424
        %v427 = vadd.f32 %v425, 1.0
        %v428 = vadd.f32 %v426, 1.0
        %v429 = vmul.f32 %v421, %v427
        %v430 = vmul.f32 %v422, %v428
        %v431 = vpack.c.bf16 %v429, %v429
        %v432 = vpack.c.bf16 %v430, %v430
        %v433 = vld [vmem:[#allocation7] sm:$0xf]
        %v434 = vld [vmem:[#allocation7 + $0x4] sm:$0xf]
        %v435 = vld [vmem:[#allocation7 + $0x8] sm:$0xf]
        %v436 = vld [vmem:[#allocation7 + $0xc] sm:$0xf]
        %v437 = vld [vmem:[#allocation7 + $0x10] sm:$0xf]
        %v438 = vld [vmem:[#allocation7 + $0x14] sm:$0xf]
        %v439 = vld [vmem:[#allocation7 + $0x18] sm:$0xf]
        %v440 = vld [vmem:[#allocation7 + $0x1c] sm:$0xf]
        %v441 = vld [vmem:[#allocation7 + $0x20] sm:$0xf]
        %v442 = vld [vmem:[#allocation7 + $0x24] sm:$0xf]
        %v443 = vld [vmem:[#allocation7 + $0x28] sm:$0xf]
        %v444 = vld [vmem:[#allocation7 + $0x2c] sm:$0xf]
        %v445 = vld [vmem:[#allocation7 + $0x30] sm:$0xf]
        %v446 = vld [vmem:[#allocation7 + $0x34] sm:$0xf]
        %v447 = vld [vmem:[#allocation7 + $0x38] sm:$0xf]
        %v448 = vld [vmem:[#allocation7 + $0x3c] sm:$0xf]
        %v449 = vld [vmem:[#allocation7 + $0x40] sm:$0xf]
        %v450 = vld [vmem:[#allocation7 + $0x44] sm:$0xf]
        %v451 = vld [vmem:[#allocation7 + $0x48] sm:$0xf]
        %v452 = vld [vmem:[#allocation7 + $0x4c] sm:$0xf]
        %v453 = vld [vmem:[#allocation7 + $0x50] sm:$0xf]
        %v454 = vld [vmem:[#allocation7 + $0x54] sm:$0xf]
        %v455 = vld [vmem:[#allocation7 + $0x58] sm:$0xf]
        %v456 = vld [vmem:[#allocation7 + $0x5c] sm:$0xf]
        %v457 = vld [vmem:[#allocation7 + $0x60] sm:$0xf]
        %v458 = vld [vmem:[#allocation7 + $0x64] sm:$0xf]
        %v459 = vld [vmem:[#allocation7 + $0x68] sm:$0xf]
        %v460 = vld [vmem:[#allocation7 + $0x6c] sm:$0xf]
        %v461 = vld [vmem:[#allocation7 + $0x70] sm:$0xf]
        %v462 = vld [vmem:[#allocation7 + $0x74] sm:$0xf]
        %v463 = vld [vmem:[#allocation7 + $0x78] sm:$0xf]
        %v464 = vld [vmem:[#allocation7 + $0x7c] sm:$0xf]
        %v465 = vld [vmem:[%s4] sm:$0x1]
        %v467 = vlaneseq
        %v468 = vshrl.u32 %v467, 7
        %v469 = vsub.s32 0, %v468
        %v470 = vrot.slane %v465, %v469
        %v504 = vunpack.c.l.b16 %v433
        %v505 = vunpack.c.l.b16 %v434
        %v506 = vunpack.c.l.b16 %v435
        %v507 = vunpack.c.l.b16 %v436
        %v508 = vunpack.c.l.b16 %v437
        %v509 = vunpack.c.l.b16 %v438
        %v510 = vunpack.c.l.b16 %v439
        %v511 = vunpack.c.l.b16 %v440
        %v512 = vunpack.c.l.b16 %v441
        %v513 = vunpack.c.l.b16 %v442
        %v514 = vunpack.c.l.b16 %v443
        %v515 = vunpack.c.l.b16 %v444
        %v516 = vunpack.c.l.b16 %v445
        %v517 = vunpack.c.l.b16 %v446
        %v518 = vunpack.c.l.b16 %v447
        %v519 = vunpack.c.l.b16 %v448
        %v520 = vunpack.c.l.b16 %v449
        %v521 = vunpack.c.l.b16 %v450
        %v522 = vunpack.c.l.b16 %v451
        %v523 = vunpack.c.l.b16 %v452
        %v524 = vunpack.c.l.b16 %v453
        %v525 = vunpack.c.l.b16 %v454
        %v526 = vunpack.c.l.b16 %v455
        %v527 = vunpack.c.l.b16 %v456
        %v528 = vunpack.c.l.b16 %v457
        %v529 = vunpack.c.l.b16 %v458
        %v530 = vunpack.c.l.b16 %v459
        %v531 = vunpack.c.l.b16 %v460
        %v532 = vunpack.c.l.b16 %v461
        %v533 = vunpack.c.l.b16 %v462
        %v534 = vunpack.c.l.b16 %v463
        %v535 = vunpack.c.l.b16 %v464
        %v536 = vpack.c.b16 %v505, %v504
        %v537 = vpack.c.b16 %v507, %v506
        %v538 = vpack.c.b16 %v509, %v508
        %v539 = vpack.c.b16 %v511, %v510
        %v540 = vpack.c.b16 %v513, %v512
        %v541 = vpack.c.b16 %v515, %v514
        %v542 = vpack.c.b16 %v517, %v516
        %v543 = vpack.c.b16 %v519, %v518
        %v544 = vpack.c.b16 %v521, %v520
        %v545 = vpack.c.b16 %v523, %v522
        %v546 = vpack.c.b16 %v525, %v524
        %v547 = vpack.c.b16 %v527, %v526
        %v548 = vpack.c.b16 %v529, %v528
        %v549 = vpack.c.b16 %v531, %v530
        %v550 = vpack.c.b16 %v533, %v532
        %v551 = vpack.c.b16 %v535, %v534
        %568 = vmatprep.subr.bf16.mxu0 0
        %569 = vmatpush1.bf16.msra.mxu0 %v536
        %570 = vmatprep.subr.bf16.mxu0 0
        %571 = vmatpush1.bf16.msra.mxu0 %v537
        %572 = vmatprep.subr.bf16.mxu0 0
        %573 = vmatpush1.bf16.msra.mxu0 %v538
        %574 = vmatprep.subr.bf16.mxu0 0
        %575 = vmatpush1.bf16.msra.mxu0 %v539
        %576 = vmatprep.subr.bf16.mxu0 0
        %577 = vmatpush1.bf16.msra.mxu0 %v540
        %578 = vmatprep.subr.bf16.mxu0 0
        %579 = vmatpush1.bf16.msra.mxu0 %v541
        %580 = vmatprep.subr.bf16.mxu0 0
        %581 = vmatpush1.bf16.msra.mxu0 %v542
        %582 = vmatprep.subr.bf16.mxu0 0
        %583 = vmatpush1.bf16.msra.mxu0 %v543
        %584 = vmatprep.subr.bf16.mxu0 0
        %585 = vmatpush1.bf16.msra.mxu0 %v544
        %586 = vmatprep.subr.bf16.mxu0 0
        %587 = vmatpush1.bf16.msra.mxu0 %v545
        %588 = vmatprep.subr.bf16.mxu0 0
        %589 = vmatpush1.bf16.msra.mxu0 %v546
        %590 = vmatprep.subr.bf16.mxu0 0
        %591 = vmatpush1.bf16.msra.mxu0 %v547
        %592 = vmatprep.subr.bf16.mxu0 0
        %593 = vmatpush1.bf16.msra.mxu0 %v548
        %594 = vmatprep.subr.bf16.mxu0 0
        %595 = vmatpush1.bf16.msra.mxu0 %v549
        %596 = vmatprep.subr.bf16.mxu0 0
        %597 = vmatpush1.bf16.msra.mxu0 %v550
        %598 = vmatprep.subr.bf16.mxu0 0
        %599 = vmatpush1.bf16.msra.mxu0 %v551
        %600 = vmatprep.mubr.bf16.mxu0 %v432
        %601 = vmatmul.mubr.bf16.gmra.mrb[0].mxu0 %v431
        %v602 = vpop.f32.mrb[0].mxu0
        %v603 = vadd.f32 %v470, %v602
        %v604 = vpop.f32.mrb[0].mxu0
        %v605 = vpop.f32.mrb[0].mxu0
        %v606 = vpop.f32.mrb[0].mxu0
        %607 = vdwg.mxu0
        %608 = vst [vmem:[%s268] sm:$0xff] %v603
        %s609 = sand.u32 %s141, 1
        %s610 = scalar_lea.sflag [#allocation4], %s609
        %s611 = sand.u32 %s141, 1
        %s612 = smul.addr %s611, 8
        %s613 = scalar_lea.vmem [#allocation8], %s612
        // Predicated region
        $region53: #{tpu_custom_call.1} parent=39 // pred_check
          %p614 = pneg %p151
        $region54: #{tpu_custom_call.1} parent=39 // pred_check_branch
          %616 = sbr.rel (%p614) target = $region56
        $region55: #{tpu_custom_call.1} parent=39 // pred_region
          %s618 = ssub.s32 128, 128
          %619 = vsyncadd %s610, %s618
          %s620 = smul.addr %s23, 128
          %s621 = scalar_lea.hbm %s5, %s620
          %s623 = sshll.u32 %s613, 4
          %s624 = int_to_ptr.vmem [resolvable:$true] %s623
          %626 = dma.vmem_to_hbm [thread:$0]  %s624, 128, %s621, %s610
        $region56: #{tpu_custom_call.1} parent=39 // pred_fallthru
          _
      $region40: #{tpu_custom_call.1} parent=5 // pred_fallthru
        _
      %p627 = scmp.le.s32.totalorder 2, %s18
      // Predicated region
      $region57: #{tpu_custom_call.1} parent=5 // pred_check
        %p628 = pneg %p627
      $region58: #{tpu_custom_call.1} parent=5 // pred_check_branch
        %630 = sbr.rel (%p628) target = $region60
      $region59: #{tpu_custom_call.1} parent=5 // pred_region
        %s631 = ssub.s32 %s18, 2
        // Predicated region
        $region61: #{tpu_custom_call.1} parent=59 // pred_check
          %p632 = pneg %p157
        $region62: #{tpu_custom_call.1} parent=59 // pred_check_branch
          %634 = sbr.rel (%p632) target = $region64
        $region63: #{tpu_custom_call.1} parent=59 // pred_region
          %s635 = sand.u32 %s142, 1
          %s636 = scalar_lea.sflag [#allocation4], %s635
          %s637 = sand.u32 %s142, 1
          %s638 = smul.addr %s637, 8
          %s639 = scalar_lea.vmem [#allocation8], %s638
          %640 = dma.done %s636, 128
        $region64: #{tpu_custom_call.1} parent=59 // pred_fallthru
          _
      $region60: #{tpu_custom_call.1} parent=5 // pred_fallthru
        _
    $region6: #{tpu_custom_call.1} parent=1 // loop_footer
      %s22 = sadd.s32 1, %s18
    $region7: #{tpu_custom_call.1} parent=1 // loop_footer_branch
      %17 = sbr.rel target = $region3
    $region8: #{tpu_custom_call.1} parent=1 // loop_exit
      _
    %641 = vsyncpa [#allocation3], 1
    %s642 = scalar_lea.sflag [#allocation3], 1
    %643 = vsyncpa %s642, 1
    %644 = vsyncpa [#allocation6], 1
    %645 = vsyncpa [#allocation4], 1
    %s646 = scalar_lea.sflag [#allocation4], 1
    %647 = vsyncpa %s646, 1

// kernel: tpu_custom_call.1
$region0: #{tpu_custom_call.1}
  #allocation0 [shape = 'u32[]', space=smem, size = 0x4, offset = 0x4, fixed_abs, tag = 'smem constant byte address 0x4 - core index']
  #allocation1 [shape = 'u32[144,128]{1,0:T(1,128)}', space=vmem, size = 0x12000, scoped, tag = 'internal scratch']
  %s0 = inlined_call_operand.hbm [shape: f32[16,128], index: 0, kind: input, shape index: {}]
  %s1 = inlined_call_operand.hbm [shape: bf16[128,256], index: 1, kind: input, shape index: {}]
  %s2 = inlined_call_operand.vmem [shape: f32[1,256], index: 2, kind: input, shape index: {}]
  %s3 = inlined_call_operand.hbm [shape: bf16[256,128], index: 3, kind: input, shape index: {}]
  %s4 = inlined_call_operand.vmem [shape: f32[1,128], index: 4, kind: input, shape index: {}]
  %s5 = inlined_call_operand.hbm [shape: f32[16,128], index: 5, kind: output, shape index: {}]
  %s6 = sld [smem:[#allocation0]]
  $region65: #{tpu_custom_call.1} parent=0
    _
  %s8 = ssub.s32 1, %s6
  %s9 = scalar_select 0, %s8, %s6
  $region1: #{tpu_custom_call.1} parent=0
    #allocation2 [shape = 'u8[8192]{0}', space=vmem, size = 0x2000, scoped, tag = 'input window, operand 0']
    #allocation3 [shape = 's32[2]{0}', space=sflag, size = 0x8, scoped, tag = 'scoped memory for tpu_custom_call.1']
    #allocation4 [shape = 's32[2]{0}', space=sflag, size = 0x8, scoped, tag = 'scoped memory for tpu_custom_call.1']
    #allocation5 [shape = 'u8[65536]{0}', space=vmem, size = 0x10000, scoped, tag = 'input window, operand 1, single buffered']
    #allocation6 [shape = 's32[1]{0}', space=sflag, size = 0x4, scoped, tag = 'scoped memory for tpu_custom_call.1']
    #allocation7 [shape = 'u8[65536]{0}', space=vmem, size = 0x10000, scoped, tag = 'input window, operand 3, single buffered']
    #allocation8 [shape = 'u8[8192]{0}', space=vmem, size = 0x2000, scoped, tag = 'output window, operand 0']
    %10 = vsyncpa [#allocation3], 0
    %s11 = scalar_lea.sflag [#allocation3], 1
    %12 = vsyncpa %s11, 0
    %13 = vsyncpa [#allocation6], 0
    %14 = vsyncpa [#allocation4], 0
    %s15 = scalar_lea.sflag [#allocation4], 1
    %16 = vsyncpa %s15, 0
    loop: start=0, step=1, limit=4
    $region2: #{tpu_custom_call.1} parent=1 // loop_pre_header
      _
    $region3: #{tpu_custom_call.1} parent=1 // loop_header
      %s18 = sphi 0, %s22
      %p19 = scmp.ge.s32.totalorder %s18, 4
      %s28 = sphi 0, %s30
      %s31 = sphi 0, %s28
      %s32 = sphi 0, %s31
      %s48 = sphi 0, %s32
      %s52 = sphi 0, %s52
      %s54 = sphi 0, %s52
      %s55 = sphi 0, %s54
      %s69 = sphi 0, %s55
      %s73 = sphi 0, %s73
      %s75 = sphi 0, %s73
      %s76 = sphi 0, %s75
      %s90 = sphi 0, %s76
      %s94 = sphi 0, %s94
      %s96 = sphi 0, %s94
      %s97 = sphi 0, %s96
      %s111 = sphi 0, %s97
      %s115 = sphi 0, %s115
      %s117 = sphi 0, %s115
      %s118 = sphi 0, %s117
      %s132 = sphi 0, %s118
      %s138 = sphi 0, %s140
      %s141 = sphi 0, %s138
      %s142 = sphi 0, %s141
      %s158 = sphi 0, %s142
    $region4: #{tpu_custom_call.1} parent=1 // loop_header_branch
      %21 = sbr.rel (%p19) target = $region8
    $region5: #{tpu_custom_call.1} parent=1 // loop_body
      %s23 = ssub.s32 %s18, 1
      %s24 = ssub.s32 %s18, 2
      %s25 = sadd.s32 %s18, 1
      %s26 = ssub.s32 %s18, %s25
      %p27 = scmp.eq.s32.totalorder %s26, 0
      %s29 = sadd.s32 %s28, 1
      %s30 = scalar_select %p27, %s28, %s29
      %p33 = pneg %p27
      %p34 = scmp.eq.s32.totalorder %s18, 1
      %p35 = por %p33, %p34
      %p36 = scmp.ne.s32.totalorder %s28, %s31
      %p37 = scmp.eq.s32.totalorder %s18, 0
      %p38 = por %p36, %p37
      %p39 = scmp.ne.s32.totalorder %s28, %s31
      %p40 = scmp.eq.s32.totalorder %s23, 1
      %p41 = por %p39, %p40
      %p42 = scmp.ne.s32.totalorder %s31, %s32
      %p43 = scmp.eq.s32.totalorder %s23, 0
      %p44 = por %p42, %p43
      %p45 = scmp.ne.s32.totalorder %s31, %s32
      %p46 = scmp.eq.s32.totalorder %s24, 1
      %p47 = por %p45, %p46
      %p49 = scmp.ne.s32.totalorder %s32, %s48
      %p50 = scmp.eq.s32.totalorder %s24, 0
      %p51 = por %p49, %p50
      %s53 = sadd.s32 %s52, 1
      %p56 = scmp.eq.s32.totalorder %s18, 1
      %p57 = scmp.ne.s32.totalorder %s52, %s54
      %p58 = scmp.eq.s32.totalorder %s18, 0
      %p59 = por %p57, %p58
      %p60 = scmp.ne.s32.totalorder %s52, %s54
      %p61 = scmp.eq.s32.totalorder %s23, 1
      %p62 = por %p60, %p61
      %p63 = scmp.ne.s32.totalorder %s54, %s55
      %p64 = scmp.eq.s32.totalorder %s23, 0
      %p65 = por %p63, %p64
      %p66 = scmp.ne.s32.totalorder %s54, %s55
      %p67 = scmp.eq.s32.totalorder %s24, 1
      %p68 = por %p66, %p67
      %p70 = scmp.ne.s32.totalorder %s55, %s69
      %p71 = scmp.eq.s32.totalorder %s24, 0
      %p72 = por %p70, %p71
      %s74 = sadd.s32 %s73, 1
      %p77 = scmp.eq.s32.totalorder %s18, 1
      %p78 = scmp.ne.s32.totalorder %s73, %s75
      %p79 = scmp.eq.s32.totalorder %s18, 0
      %p80 = por %p78, %p79
      %p81 = scmp.ne.s32.totalorder %s73, %s75
      %p82 = scmp.eq.s32.totalorder %s23, 1
      %p83 = por %p81, %p82
      %p84 = scmp.ne.s32.totalorder %s75, %s76
      %p85 = scmp.eq.s32.totalorder %s23, 0
      %p86 = por %p84, %p85
      %p87 = scmp.ne.s32.totalorder %s75, %s76
      %p88 = scmp.eq.s32.totalorder %s24, 1
      %p89 = por %p87, %p88
      %p91 = scmp.ne.s32.totalorder %s76, %s90
      %p92 = scmp.eq.s32.totalorder %s24, 0
      %p93 = por %p91, %p92
      %s95 = sadd.s32 %s94, 1
      %p98 = scmp.eq.s32.totalorder %s18, 1
      %p99 = scmp.ne.s32.totalorder %s94, %s96
      %p100 = scmp.eq.s32.totalorder %s18, 0
      %p101 = por %p99, %p100
      %p102 = scmp.ne.s32.totalorder %s94, %s96
      %p103 = scmp.eq.s32.totalorder %s23, 1
      %p104 = por %p102, %p103
      %p105 = scmp.ne.s32.totalorder %s96, %s97
      %p106 = scmp.eq.s32.totalorder %s23, 0
      %p107 = por %p105, %p106
      %p108 = scmp.ne.s32.totalorder %s96, %s97
      %p109 = scmp.eq.s32.totalorder %s24, 1
      %p110 = por %p108, %p109
      %p112 = scmp.ne.s32.totalorder %s97, %s111
      %p113 = scmp.eq.s32.totalorder %s24, 0
      %p114 = por %p112, %p113
      %s116 = sadd.s32 %s115, 1
      %p119 = scmp.eq.s32.totalorder %s18, 1
      %p120 = scmp.ne.s32.totalorder %s115, %s117
      %p121 = scmp.eq.s32.totalorder %s18, 0
      %p122 = por %p120, %p121
      %p123 = scmp.ne.s32.totalorder %s115, %s117
      %p124 = scmp.eq.s32.totalorder %s23, 1
      %p125 = por %p123, %p124
      %p126 = scmp.ne.s32.totalorder %s117, %s118
      %p127 = scmp.eq.s32.totalorder %s23, 0
      %p128 = por %p126, %p127
      %p129 = scmp.ne.s32.totalorder %s117, %s118
      %p130 = scmp.eq.s32.totalorder %s24, 1
      %p131 = por %p129, %p130
      %p133 = scmp.ne.s32.totalorder %s118, %s132
      %p134 = scmp.eq.s32.totalorder %s24, 0
      %p135 = por %p133, %p134
      %s136 = ssub.s32 %s18, %s25
      %p137 = scmp.eq.s32.totalorder %s136, 0
      %s139 = sadd.s32 %s138, 1
      %s140 = scalar_select %p137, %s138, %s139
      %p143 = pneg %p137
      %p144 = scmp.eq.s32.totalorder %s18, 1
      %p145 = por %p143, %p144
      %p146 = scmp.ne.s32.totalorder %s138, %s141
      %p147 = scmp.eq.s32.totalorder %s18, 0
      %p148 = por %p146, %p147
      %p149 = scmp.ne.s32.totalorder %s138, %s141
      %p150 = scmp.eq.s32.totalorder %s23, 1
      %p151 = por %p149, %p150
      %p152 = scmp.ne.s32.totalorder %s141, %s142
      %p153 = scmp.eq.s32.totalorder %s23, 0
      %p154 = por %p152, %p153
      %p155 = scmp.ne.s32.totalorder %s141, %s142
      %p156 = scmp.eq.s32.totalorder %s24, 1
      %p157 = por %p155, %p156
      %p159 = scmp.ne.s32.totalorder %s142, %s158
      %p160 = scmp.eq.s32.totalorder %s24, 0
      %p161 = por %p159, %p160
      %p162 = scmp.le.s32.totalorder 1, %s18
      %p163 = scmp.lt.s32.totalorder %s18, 3
      %p164 = pnand %p162, %p163
      %p165 = pneg %p164
      // Predicated region
      $region9: #{tpu_custom_call.1} parent=5 // pred_check
        _
      $region10: #{tpu_custom_call.1} parent=5 // pred_check_branch
        %167 = sbr.rel (%p164) target = $region12
      $region11: #{tpu_custom_call.1} parent=5 // pred_region
        %s168 = ssub.s32 %s18, 1
        // Predicated region
        $region13: #{tpu_custom_call.1} parent=11 // pred_check
          %p169 = pneg %p65
        $region14: #{tpu_custom_call.1} parent=11 // pred_check_branch
          %171 = sbr.rel (%p169) target = $region16
        $region15: #{tpu_custom_call.1} parent=11 // pred_region
          %s173 = ssub.s32 2048, 2048
          %174 = vsyncadd [#allocation6], %s173
          %s175 = sshll.u32 [#allocation5], 4
          %s176 = int_to_ptr.vmem [resolvable:$true] %s175
          %181 = dma.hbm_to_vmem [thread:$0]  %s1, 2048, %s176, [#allocation6], 128, 128, 8
        $region16: #{tpu_custom_call.1} parent=11 // pred_fallthru
          _
        // Predicated region
        $region17: #{tpu_custom_call.1} parent=11 // pred_check
          %p182 = pneg %p86
        $region18: #{tpu_custom_call.1} parent=11 // pred_check_branch
          %184 = sbr.rel (%p182) target = $region20
        $region19: #{tpu_custom_call.1} parent=11 // pred_region
          _
        $region20: #{tpu_custom_call.1} parent=11 // pred_fallthru
          _
        // Predicated region
        $region21: #{tpu_custom_call.1} parent=11 // pred_check
          %p185 = pneg %p107
        $region22: #{tpu_custom_call.1} parent=11 // pred_check_branch
          %187 = sbr.rel (%p185) target = $region24
        $region23: #{tpu_custom_call.1} parent=11 // pred_region
          %s189 = ssub.s32 2048, 2048
          %190 = vsyncadd [#allocation6], %s189
          %s191 = sshll.u32 [#allocation7], 4
          %s192 = int_to_ptr.vmem [resolvable:$true] %s191
          %197 = dma.hbm_to_vmem [thread:$0]  %s3, 2048, %s192, [#allocation6], 64, 64, 4
        $region24: #{tpu_custom_call.1} parent=11 // pred_fallthru
          _
        // Predicated region
        $region25: #{tpu_custom_call.1} parent=11 // pred_check
          %p198 = pneg %p128
        $region26: #{tpu_custom_call.1} parent=11 // pred_check_branch
          %200 = sbr.rel (%p198) target = $region28
        $region27: #{tpu_custom_call.1} parent=11 // pred_region
          _
        $region28: #{tpu_custom_call.1} parent=11 // pred_fallthru
          _
      $region12: #{tpu_custom_call.1} parent=5 // pred_fallthru
        _
      %p201 = scmp.lt.s32.totalorder %s18, 2
      // Predicated region
      $region29: #{tpu_custom_call.1} parent=5 // pred_check
        %p202 = pneg %p201
      $region30: #{tpu_custom_call.1} parent=5 // pred_check_branch
        %204 = sbr.rel (%p202) target = $region32
      $region31: #{tpu_custom_call.1} parent=5 // pred_region
        // Predicated region
        $region33: #{tpu_custom_call.1} parent=31 // pred_check
          %p205 = pneg %p38
        $region34: #{tpu_custom_call.1} parent=31 // pred_check_branch
          %207 = sbr.rel (%p205) target = $region36
        $region35: #{tpu_custom_call.1} parent=31 // pred_region
          %s208 = sand.u32 %s28, 1
          %s209 = scalar_lea.sflag [#allocation3], %s208
          %s210 = sand.u32 %s28, 1
          %s211 = smul.addr %s210, 8
          %s212 = scalar_lea.vmem [#allocation2], %s211
          %s214 = ssub.s32 128, 128
          %215 = vsyncadd %s209, %s214
          %s216 = smul.addr %s18, 128
          %s217 = scalar_lea.hbm %s0, %s216
          %s219 = sshll.u32 %s212, 4
          %s220 = int_to_ptr.vmem [resolvable:$true] %s219
          %222 = dma.hbm_to_vmem [thread:$0]  %s217, 128, %s220, %s209
        $region36: #{tpu_custom_call.1} parent=31 // pred_fallthru
          _
      $region32: #{tpu_custom_call.1} parent=5 // pred_fallthru
        _
      %p223 = scmp.le.s32.totalorder 1, %s18
      %p224 = scmp.lt.s32.totalorder %s18, 3
      %p225 = pnand %p223, %p224
      %p226 = pneg %p225
      // Predicated region
      $region37: #{tpu_custom_call.1} parent=5 // pred_check
        _
      $region38: #{tpu_custom_call.1} parent=5 // pred_check_branch
        %228 = sbr.rel (%p225) target = $region40
      $region39: #{tpu_custom_call.1} parent=5 // pred_region
        %s229 = ssub.s32 %s18, 1
        %s230 = sand.u32 %s31, 1
        %s231 = scalar_lea.sflag [#allocation3], %s230
        %s232 = sand.u32 %s31, 1
        %s233 = smul.addr %s232, 8
        %s234 = scalar_lea.vmem [#allocation2], %s233
        // Predicated region
        $region41: #{tpu_custom_call.1} parent=39 // pred_check
          %p235 = pneg %p44
        $region42: #{tpu_custom_call.1} parent=39 // pred_check_branch
          %237 = sbr.rel (%p235) target = $region44
        $region43: #{tpu_custom_call.1} parent=39 // pred_region
          %238 = dma.done %s231, 128
        $region44: #{tpu_custom_call.1} parent=39 // pred_fallthru
          _
        // Predicated region
        $region45: #{tpu_custom_call.1} parent=39 // pred_check
          %p239 = pneg %p65
        $region46: #{tpu_custom_call.1} parent=39 // pred_check_branch
          %241 = sbr.rel (%p239) target = $region48
        $region47: #{tpu_custom_call.1} parent=39 // pred_region
          %242 = dma.done [#allocation6], 2048
        $region48: #{tpu_custom_call.1} parent=39 // pred_fallthru
          _
        // Predicated region
        $region49: #{tpu_custom_call.1} parent=39 // pred_check
          %p243 = pneg %p107
        $region50: #{tpu_custom_call.1} parent=39 // pred_check_branch
          %245 = sbr.rel (%p243) target = $region52
        $region51: #{tpu_custom_call.1} parent=39 // pred_region
          %246 = dma.done [#allocation6], 2048
        $region52: #{tpu_custom_call.1} parent=39 // pred_fallthru
          _
        %s247 = sand.u32 %s31, 1
        %s248 = scalar_lea.sflag [#allocation3], %s247
        %s249 = sand.u32 %s31, 1
        %s250 = smul.addr %s249, 8
        %s251 = scalar_lea.vmem [#allocation2], %s250
        %p252 = pneg %p44
        %p253 = pneg %p41
        %p254 = pneg %p65
        %p255 = pneg %p62
        %p256 = pneg %p86
        %p257 = pneg %p83
        %p258 = pneg %p107
        %p259 = pneg %p104
        %p260 = pneg %p128
        %p261 = pneg %p125
        %p262 = pneg %p154
        %p263 = pneg %p151
        %s264 = sand.u32 %s141, 1
        %s265 = scalar_lea.sflag [#allocation4], %s264
        %s266 = sand.u32 %s141, 1
        %s267 = smul.addr %s266, 8
        %s268 = scalar_lea.vmem [#allocation8], %s267
        %v270 = vld [vmem:[%s234] sm:$0xff]
        %v271 = vpack.c.bf16 %v270, %v270
        %v272 = vld [vmem:[#allocation5] sm:$0xff]
        %v273 = vld [vmem:[#allocation5 + $0x8] sm:$0xff]
        %v274 = vld [vmem:[#allocation5 + $0x10] sm:$0xff]
        %v275 = vld [vmem:[#allocation5 + $0x18] sm:$0xff]
        %v276 = vld [vmem:[#allocation5 + $0x20] sm:$0xff]
        %v277 = vld [vmem:[#allocation5 + $0x28] sm:$0xff]
        %v278 = vld [vmem:[#allocation5 + $0x30] sm:$0xff]
        %v279 = vld [vmem:[#allocation5 + $0x38] sm:$0xff]
        %v280 = vld [vmem:[#allocation5 + $0x40] sm:$0xff]
        %v281 = vld [vmem:[#allocation5 + $0x48] sm:$0xff]
        %v282 = vld [vmem:[#allocation5 + $0x50] sm:$0xff]
        %v283 = vld [vmem:[#allocation5 + $0x58] sm:$0xff]
        %v284 = vld [vmem:[#allocation5 + $0x60] sm:$0xff]
        %v285 = vld [vmem:[#allocation5 + $0x68] sm:$0xff]
        %v286 = vld [vmem:[#allocation5 + $0x70] sm:$0xff]
        %v287 = vld [vmem:[#allocation5 + $0x78] sm:$0xff]
        %v288 = vld [vmem:[%s2] sm:$0x3]
        %v290 = vlaneseq
        %v291 = vshrl.u32 %v290, 7
        %v292 = vsub.s32 0, %v291
        %v293 = vrot.slane %v288, %v292
        %v294 = vlaneseq
        %v295 = vshrl.u32 %v294, 7
        %v296 = vsub.s32 1, %v295
        %v297 = vrot.slane %v288, %v296
        %v316 = vunpack.c.l.b16 %v272
        %v317 = vunpack.c.h.b16 %v272
        %v318 = vunpack.c.l.b16 %v273
        %v319 = vunpack.c.h.b16 %v273
        %v320 = vunpack.c.l.b16 %v274
        %v321 = vunpack.c.h.b16 %v274
        %v322 = vunpack.c.l.b16 %v275
        %v323 = vunpack.c.h.b16 %v275
        %v324 = vunpack.c.l.b16 %v276
        %v325 = vunpack.c.h.b16 %v276
        %v326 = vunpack.c.l.b16 %v277
        %v327 = vunpack.c.h.b16 %v277
        %v328 = vunpack.c.l.b16 %v278
        %v329 = vunpack.c.h.b16 %v278
        %v330 = vunpack.c.l.b16 %v279
        %v331 = vunpack.c.h.b16 %v279
        %v332 = vunpack.c.l.b16 %v280
        %v333 = vunpack.c.h.b16 %v280
        %v334 = vunpack.c.l.b16 %v281
        %v335 = vunpack.c.h.b16 %v281
        %v336 = vunpack.c.l.b16 %v282
        %v337 = vunpack.c.h.b16 %v282
        %v338 = vunpack.c.l.b16 %v283
        %v339 = vunpack.c.h.b16 %v283
        %v340 = vunpack.c.l.b16 %v284
        %v341 = vunpack.c.h.b16 %v284
        %v342 = vunpack.c.l.b16 %v285
        %v343 = vunpack.c.h.b16 %v285
        %v344 = vunpack.c.l.b16 %v286
        %v345 = vunpack.c.h.b16 %v286
        %v346 = vunpack.c.l.b16 %v287
        %v347 = vunpack.c.h.b16 %v287
        %v348 = vpack.c.b16 %v318, %v316
        %v349 = vpack.c.b16 %v319, %v317
        %v350 = vpack.c.b16 %v322, %v320
        %v351 = vpack.c.b16 %v323, %v321
        %v352 = vpack.c.b16 %v326, %v324
        %v353 = vpack.c.b16 %v327, %v325
        %v354 = vpack.c.b16 %v330, %v328
        %v355 = vpack.c.b16 %v331, %v329
        %v356 = vpack.c.b16 %v334, %v332
        %v357 = vpack.c.b16 %v335, %v333
        %v358 = vpack.c.b16 %v338, %v336
        %v359 = vpack.c.b16 %v339, %v337
        %v360 = vpack.c.b16 %v342, %v340
        %v361 = vpack.c.b16 %v343, %v341
        %v362 = vpack.c.b16 %v346, %v344
        %v363 = vpack.c.b16 %v347, %v345
        %380 = vmatprep.subr.bf16.mxu0 %v349
        %381 = vmatpush1.bf16.msra.mxu0 %v348
        %382 = vmatprep.subr.bf16.mxu0 %v351
        %383 = vmatpush1.bf16.msra.mxu0 %v350
        %384 = vmatprep.subr.bf16.mxu0 %v353
        %385 = vmatpush1.bf16.msra.mxu0 %v352
        %386 = vmatprep.subr.bf16.mxu0 %v355
        %387 = vmatpush1.bf16.msra.mxu0 %v354
        %388 = vmatprep.subr.bf16.mxu0 %v357
        %389 = vmatpush1.bf16.msra.mxu0 %v356
        %390 = vmatprep.subr.bf16.mxu0 %v359
        %391 = vmatpush1.bf16.msra.mxu0 %v358
        %392 = vmatprep.subr.bf16.mxu0 %v361
        %393 = vmatpush1.bf16.msra.mxu0 %v360
        %394 = vmatprep.subr.bf16.mxu0 %v363
        %395 = vmatpush1.bf16.msra.mxu0 %v362
        %396 = vmatprep.subr.bf16.mxu0 0
        %397 = vmatpush1.bf16.msra.mxu0 0
        %398 = vmatprep.subr.bf16.mxu0 0
        %399 = vmatpush1.bf16.msra.mxu0 0
        %400 = vmatprep.subr.bf16.mxu0 0
        %401 = vmatpush1.bf16.msra.mxu0 0
        %402 = vmatprep.subr.bf16.mxu0 0
        %403 = vmatpush1.bf16.msra.mxu0 0
        %404 = vmatprep.subr.bf16.mxu0 0
        %405 = vmatpush1.bf16.msra.mxu0 0
        %406 = vmatprep.subr.bf16.mxu0 0
        %407 = vmatpush1.bf16.msra.mxu0 0
        %408 = vmatprep.subr.bf16.mxu0 0
        %409 = vmatpush1.bf16.msra.mxu0 0
        %410 = vmatprep.subr.bf16.mxu0 0
        %411 = vmatpush1.bf16.msra.mxu0 0
        %412 = vmatprep.mubr.bf16.mxu0 0
        %413 = vmatmul.mubr.bf16.gmra.mrb[0].mxu0 %v271
        %v414 = vpop.f32.mrb[0].mxu0
        %v415 = vadd.f32 %v293, %v414
        %v416 = vpop.f32.mrb[0].mxu0
        %v417 = vadd.f32 %v297, %v416
        %v418 = vpop.f32.mrb[0].mxu0
        %v419 = vpop.f32.mrb[0].mxu0
        %420 = vdwg.mxu0
        %v421 = vmul.f32 %v415, 0.5
        %v422 = vmul.f32 %v417, 0.5
        %v423 = vmul.f32 %v415, 0.70710677
        %v424 = vmul.f32 %v417, 0.70710677
        %v425 = verf.f32.pop %v423
        %v426 = verf.f32.pop %v424
        %v427 = vadd.f32 %v425, 1.0
        %v428 = vadd.f32 %v426, 1.0
        %v429 = vmul.f32 %v421, %v427
        %v430 = vmul.f32 %v422, %v428
        %v431 = vpack.c.bf16 %v429, %v429
        %v432 = vpack.c.bf16 %v430, %v430
        %v433 = vld [vmem:[#allocation7] sm:$0xf]
        %v434 = vld [vmem:[#allocation7 + $0x4] sm:$0xf]
        %v435 = vld [vmem:[#allocation7 + $0x8] sm:$0xf]
        %v436 = vld [vmem:[#allocation7 + $0xc] sm:$0xf]
        %v437 = vld [vmem:[#allocation7 + $0x10] sm:$0xf]
        %v438 = vld [vmem:[#allocation7 + $0x14] sm:$0xf]
        %v439 = vld [vmem:[#allocation7 + $0x18] sm:$0xf]
        %v440 = vld [vmem:[#allocation7 + $0x1c] sm:$0xf]
        %v441 = vld [vmem:[#allocation7 + $0x20] sm:$0xf]
        %v442 = vld [vmem:[#allocation7 + $0x24] sm:$0xf]
        %v443 = vld [vmem:[#allocation7 + $0x28] sm:$0xf]
        %v444 = vld [vmem:[#allocation7 + $0x2c] sm:$0xf]
        %v445 = vld [vmem:[#allocation7 + $0x30] sm:$0xf]
        %v446 = vld [vmem:[#allocation7 + $0x34] sm:$0xf]
        %v447 = vld [vmem:[#allocation7 + $0x38] sm:$0xf]
        %v448 = vld [vmem:[#allocation7 + $0x3c] sm:$0xf]
        %v449 = vld [vmem:[#allocation7 + $0x40] sm:$0xf]
        %v450 = vld [vmem:[#allocation7 + $0x44] sm:$0xf]
        %v451 = vld [vmem:[#allocation7 + $0x48] sm:$0xf]
        %v452 = vld [vmem:[#allocation7 + $0x4c] sm:$0xf]
        %v453 = vld [vmem:[#allocation7 + $0x50] sm:$0xf]
        %v454 = vld [vmem:[#allocation7 + $0x54] sm:$0xf]
        %v455 = vld [vmem:[#allocation7 + $0x58] sm:$0xf]
        %v456 = vld [vmem:[#allocation7 + $0x5c] sm:$0xf]
        %v457 = vld [vmem:[#allocation7 + $0x60] sm:$0xf]
        %v458 = vld [vmem:[#allocation7 + $0x64] sm:$0xf]
        %v459 = vld [vmem:[#allocation7 + $0x68] sm:$0xf]
        %v460 = vld [vmem:[#allocation7 + $0x6c] sm:$0xf]
        %v461 = vld [vmem:[#allocation7 + $0x70] sm:$0xf]
        %v462 = vld [vmem:[#allocation7 + $0x74] sm:$0xf]
        %v463 = vld [vmem:[#allocation7 + $0x78] sm:$0xf]
        %v464 = vld [vmem:[#allocation7 + $0x7c] sm:$0xf]
        %v465 = vld [vmem:[%s4] sm:$0x1]
        %v467 = vlaneseq
        %v468 = vshrl.u32 %v467, 7
        %v469 = vsub.s32 0, %v468
        %v470 = vrot.slane %v465, %v469
        %v504 = vunpack.c.l.b16 %v433
        %v505 = vunpack.c.l.b16 %v434
        %v506 = vunpack.c.l.b16 %v435
        %v507 = vunpack.c.l.b16 %v436
        %v508 = vunpack.c.l.b16 %v437
        %v509 = vunpack.c.l.b16 %v438
        %v510 = vunpack.c.l.b16 %v439
        %v511 = vunpack.c.l.b16 %v440
        %v512 = vunpack.c.l.b16 %v441
        %v513 = vunpack.c.l.b16 %v442
        %v514 = vunpack.c.l.b16 %v443
        %v515 = vunpack.c.l.b16 %v444
        %v516 = vunpack.c.l.b16 %v445
        %v517 = vunpack.c.l.b16 %v446
        %v518 = vunpack.c.l.b16 %v447
        %v519 = vunpack.c.l.b16 %v448
        %v520 = vunpack.c.l.b16 %v449
        %v521 = vunpack.c.l.b16 %v450
        %v522 = vunpack.c.l.b16 %v451
        %v523 = vunpack.c.l.b16 %v452
        %v524 = vunpack.c.l.b16 %v453
        %v525 = vunpack.c.l.b16 %v454
        %v526 = vunpack.c.l.b16 %v455
        %v527 = vunpack.c.l.b16 %v456
        %v528 = vunpack.c.l.b16 %v457
        %v529 = vunpack.c.l.b16 %v458
        %v530 = vunpack.c.l.b16 %v459
        %v531 = vunpack.c.l.b16 %v460
        %v532 = vunpack.c.l.b16 %v461
        %v533 = vunpack.c.l.b16 %v462
        %v534 = vunpack.c.l.b16 %v463
        %v535 = vunpack.c.l.b16 %v464
        %v536 = vpack.c.b16 %v505, %v504
        %v537 = vpack.c.b16 %v507, %v506
        %v538 = vpack.c.b16 %v509, %v508
        %v539 = vpack.c.b16 %v511, %v510
        %v540 = vpack.c.b16 %v513, %v512
        %v541 = vpack.c.b16 %v515, %v514
        %v542 = vpack.c.b16 %v517, %v516
        %v543 = vpack.c.b16 %v519, %v518
        %v544 = vpack.c.b16 %v521, %v520
        %v545 = vpack.c.b16 %v523, %v522
        %v546 = vpack.c.b16 %v525, %v524
        %v547 = vpack.c.b16 %v527, %v526
        %v548 = vpack.c.b16 %v529, %v528
        %v549 = vpack.c.b16 %v531, %v530
        %v550 = vpack.c.b16 %v533, %v532
        %v551 = vpack.c.b16 %v535, %v534
        %568 = vmatprep.subr.bf16.mxu0 0
        %569 = vmatpush1.bf16.msra.mxu0 %v536
        %570 = vmatprep.subr.bf16.mxu0 0
        %571 = vmatpush1.bf16.msra.mxu0 %v537
        %572 = vmatprep.subr.bf16.mxu0 0
        %573 = vmatpush1.bf16.msra.mxu0 %v538
        %574 = vmatprep.subr.bf16.mxu0 0
        %575 = vmatpush1.bf16.msra.mxu0 %v539
        %576 = vmatprep.subr.bf16.mxu0 0
        %577 = vmatpush1.bf16.msra.mxu0 %v540
        %578 = vmatprep.subr.bf16.mxu0 0
        %579 = vmatpush1.bf16.msra.mxu0 %v541
        %580 = vmatprep.subr.bf16.mxu0 0
        %581 = vmatpush1.bf16.msra.mxu0 %v542
        %582 = vmatprep.subr.bf16.mxu0 0
        %583 = vmatpush1.bf16.msra.mxu0 %v543
        %584 = vmatprep.subr.bf16.mxu0 0
        %585 = vmatpush1.bf16.msra.mxu0 %v544
        %586 = vmatprep.subr.bf16.mxu0 0
        %587 = vmatpush1.bf16.msra.mxu0 %v545
        %588 = vmatprep.subr.bf16.mxu0 0
        %589 = vmatpush1.bf16.msra.mxu0 %v546
        %590 = vmatprep.subr.bf16.mxu0 0
        %591 = vmatpush1.bf16.msra.mxu0 %v547
        %592 = vmatprep.subr.bf16.mxu0 0
        %593 = vmatpush1.bf16.msra.mxu0 %v548
        %594 = vmatprep.subr.bf16.mxu0 0
        %595 = vmatpush1.bf16.msra.mxu0 %v549
        %596 = vmatprep.subr.bf16.mxu0 0
        %597 = vmatpush1.bf16.msra.mxu0 %v550
        %598 = vmatprep.subr.bf16.mxu0 0
        %599 = vmatpush1.bf16.msra.mxu0 %v551
        %600 = vmatprep.mubr.bf16.mxu0 %v432
        %601 = vmatmul.mubr.bf16.gmra.mrb[0].mxu0 %v431
        %v602 = vpop.f32.mrb[0].mxu0
        %v603 = vadd.f32 %v470, %v602
        %v604 = vpop.f32.mrb[0].mxu0
        %v605 = vpop.f32.mrb[0].mxu0
        %v606 = vpop.f32.mrb[0].mxu0
        %607 = vdwg.mxu0
        %608 = vst [vmem:[%s268] sm:$0xff] %v603
        %s609 = sand.u32 %s141, 1
        %s610 = scalar_lea.sflag [#allocation4], %s609
        %s611 = sand.u32 %s141, 1
        %s612 = smul.addr %s611, 8
        %s613 = scalar_lea.vmem [#allocation8], %s612
        // Predicated region
        $region53: #{tpu_custom_call.1} parent=39 // pred_check
          %p614 = pneg %p151
        $region54: #{tpu_custom_call.1} parent=39 // pred_check_branch
          %616 = sbr.rel (%p614) target = $region56
        $region55: #{tpu_custom_call.1} parent=39 // pred_region
          %s618 = ssub.s32 128, 128
          %619 = vsyncadd %s610, %s618
          %s620 = smul.addr %s23, 128
          %s621 = scalar_lea.hbm %s5, %s620
          %s623 = sshll.u32 %s613, 4
          %s624 = int_to_ptr.vmem [resolvable:$true] %s623
          %626 = dma.vmem_to_hbm [thread:$0]  %s624, 128, %s621, %s610
        $region56: #{tpu_custom_call.1} parent=39 // pred_fallthru
          _
      $region40: #{tpu_custom_call.1} parent=5 // pred_fallthru
        _
      %p627 = scmp.le.s32.totalorder 2, %s18
      // Predicated region
      $region57: #{tpu_custom_call.1} parent=5 // pred_check
        %p628 = pneg %p627
      $region58: #{tpu_custom_call.1} parent=5 // pred_check_branch
        %630 = sbr.rel (%p628) target = $region60
      $region59: #{tpu_custom_call.1} parent=5 // pred_region
        %s631 = ssub.s32 %s18, 2
        // Predicated region
        $region61: #{tpu_custom_call.1} parent=59 // pred_check
          %p632 = pneg %p157
        $region62: #{tpu_custom_call.1} parent=59 // pred_check_branch
          %634 = sbr.rel (%p632) target = $region64
        $region63: #{tpu_custom_call.1} parent=59 // pred_region
          %s635 = sand.u32 %s142, 1
          %s636 = scalar_lea.sflag [#allocation4], %s635
          %s637 = sand.u32 %s142, 1
          %s638 = smul.addr %s637, 8
          %s639 = scalar_lea.vmem [#allocation8], %s638
          %640 = dma.done %s636, 128
        $region64: #{tpu_custom_call.1} parent=59 // pred_fallthru
          _
      $region60: #{tpu_custom_call.1} parent=5 // pred_fallthru
        _
    $region6: #{tpu_custom_call.1} parent=1 // loop_footer
      %s22 = sadd.s32 1, %s18
    $region7: #{tpu_custom_call.1} parent=1 // loop_footer_branch
      %17 = sbr.rel target = $region3
    $region8: #{tpu_custom_call.1} parent=1 // loop_exit
      _
    %641 = vsyncpa [#allocation3], 1
    %s642 = scalar_lea.sflag [#allocation3], 1
    %643 = vsyncpa %s642, 1
    %644 = vsyncpa [#allocation6], 1
    %645 = vsyncpa [#allocation4], 1
    %s646 = scalar_lea.sflag [#allocation4], 1
    %647 = vsyncpa %s646, 1

</llo_original>
